<compile_context>
chip_gen: v7x
topology: tpu7x:2x2x1
jax: 0.10.0
libtpu: 0.0.40
codegen_flags: <defaults>
</compile_context>

<pallas_src>
import jax
import jax.numpy as jnp
from jax.experimental import pallas as pl
from jax.experimental.pallas import tpu as pltpu


# ---------------------------------------------------------------------------
# Kernels
# ---------------------------------------------------------------------------

def _make_batch_kernel(mxu_bf16):
    """Whole graph per block; grid is (batch_tiles,)."""

    def kernel(x_ref, adj_ref, w_ref, b_ref, o_ref):
        # x_ref: (Bt, N, F)   adj_ref: (Bt, N, N)   w_ref: (F, Cp)
        # b_ref: (1, Cp)      o_ref:   (Bt, N, Cp)
        bt, n, f = x_ref.shape
        cp = w_ref.shape[1]

        adj = adj_ref[...]                                       # bf16 or f32
        # Self-loops: diagonal := 1 (improved=False).
        row = jax.lax.broadcasted_iota(jnp.int32, (n, n), 0)
        col = jax.lax.broadcasted_iota(jnp.int32, (n, n), 1)
        diag = (row == col)[None, :, :]
        adj = jnp.where(diag, 1.0, adj)

        # D^{-1/2} with clamp(min=1); summed in f32 (exact for 0/1 adjacency).
        deg = jnp.sum(adj.astype(jnp.float32), axis=-1, keepdims=True)
        d = jax.lax.rsqrt(jnp.maximum(deg, jnp.float32(1.0)))    # (Bt, N, 1)

        # Feature transform: fold Bt*N into the MXU M dimension.
        x = x_ref[...].astype(jnp.float32)
        xw = jnp.dot(x.reshape(bt * n, f), w_ref[...],
                     preferred_element_type=jnp.float32).reshape(bt, n, cp)

        # Factored normalization: out = d * (A @ (d * xw)) + bias.
        xw_scaled = d * xw
        if mxu_bf16:
            adj_mm = adj.astype(jnp.bfloat16)
            xw_mm = xw_scaled.astype(jnp.bfloat16)
        else:
            adj_mm = adj.astype(jnp.float32)
            xw_mm = xw_scaled
        agg = jnp.einsum('bij,bjc->bic', adj_mm, xw_mm,
                         preferred_element_type=jnp.float32)
        out = d * agg + b_ref[...]
        o_ref[...] = out.astype(o_ref.dtype)                     # lane-dense

    return kernel


def _make_row_kernel(mxu_bf16, row_tile):
    """Row-tiled aggregation; grid is (B, N // row_tile), both parallel.

    D^{-1/2} is precomputed per batch (d_full / d_row inputs) because a row
    tile cannot see the degrees of its contraction columns.
    """

    def kernel(d_full_ref, d_row_ref, x_ref, adj_ref, w_ref, b_ref, o_ref):
        # d_full_ref: (1, N, 1)  d_row_ref: (1, Nt, 1)  x_ref: (1, N, F)
        # adj_ref:    (1, Nt, N) w_ref: (F, Cp)  b_ref: (1, Cp)
        # o_ref:      (1, Nt, Cp)
        bt, nt, n = adj_ref.shape
        f = x_ref.shape[2]
        cp = w_ref.shape[1]

        adj = adj_ref[...]
        # Self-loop patch inside this row tile: entry (i, r0 + i) := 1.
        r0 = pl.program_id(1) * row_tile
        row = jax.lax.broadcasted_iota(jnp.int32, (nt, n), 0)
        col = jax.lax.broadcasted_iota(jnp.int32, (nt, n), 1)
        diag = (col == row + r0)[None, :, :]
        adj = jnp.where(diag, 1.0, adj)

        x = x_ref[...].astype(jnp.float32)
        xw = jnp.dot(x.reshape(bt * n, f), w_ref[...],
                     preferred_element_type=jnp.float32).reshape(bt, n, cp)
        xw_scaled = d_full_ref[...] * xw                         # (1, N, Cp)

        if mxu_bf16:
            adj_mm = adj.astype(jnp.bfloat16)
            xw_mm = xw_scaled.astype(jnp.bfloat16)
        else:
            adj_mm = adj.astype(jnp.float32)
            xw_mm = xw_scaled
        agg = jnp.einsum('bij,bjc->bic', adj_mm, xw_mm,
                         preferred_element_type=jnp.float32)     # (1, Nt, Cp)
        out = d_row_ref[...] * agg + b_ref[...]
        o_ref[...] = out.astype(o_ref.dtype)

    return kernel


# ---------------------------------------------------------------------------
# VMEM policy & tile selection
# ---------------------------------------------------------------------------

def _vmem_capacity_bytes():
    """Physical VMEM per TensorCore; falls back to 128 MiB if unavailable."""
    try:
        info = pltpu.get_tpu_info()
        cap = getattr(info, "vmem_capacity_bytes", None)
        if cap:
            return int(cap)
    except Exception:
        pass
    return 128 * 2**20


def _vmem_policy():
    cap = _vmem_capacity_bytes()
    small_vmem = cap <= 64 * 2**20          # v7x-class: 64 MiB / TensorCore
    if small_vmem:
        block_budget = 14 * 2**20           # room for double buffers + temps
        vmem_cap = 52 * 2**20               # headroom below 64 MiB physical
    else:                                   # v5e / v6e: 128 MiB
        block_budget = 40 * 2**20
        vmem_cap = 100 * 2**20
    return small_vmem, block_budget, vmem_cap


def _batch_tile_bytes(bt, N, F, Cp, adj_bytes):
    per_b = (2 * adj_bytes * N * N        # adj block, double buffered
             + 4 * N * N                  # in-kernel patched / upcast adj copy
             + 8 * N * F                  # x block, double buffered (f32)
             + 8 * N * Cp                 # out block, double buffered (f32)
             + 16 * N * Cp)               # xw / xw_scaled / agg / out temps
    fixed = 8 * (F * Cp + Cp)             # weight + bias, double buffered
    return fixed + bt * per_b


def _row_tile_bytes(nt, N, F, Cp, adj_bytes):
    return (8 * (F * Cp + Cp)             # weight + bias, double buffered
            + 2 * adj_bytes * nt * N      # adj row block, double buffered
            + 4 * nt * N                  # patched / upcast adj copy
            + 8 * N * F                   # x block (full graph), double buf
            + 8 * N                       # d_full / d_row blocks
            + 8 * N * Cp                  # xw, xw_scaled temporaries
            + 16 * nt * Cp)               # out block + agg/out temporaries


def _choose_batch_tile(B, N, F, Cp, adj_bytes, block_budget, want_two_steps):
    best = None
    for bt in range(1, B + 1):
        if B % bt:
            continue
        if _batch_tile_bytes(bt, N, F, Cp, adj_bytes) > block_budget:
            continue
        if want_two_steps and B > 1 and B // bt < 2:
            continue
        best = bt
    return best


def _choose_row_tile(B, N, F, Cp, adj_bytes, block_budget, want_two_steps):
    cands = [nt for nt in range(8, N + 1, 8) if N % nt == 0]
    if not cands:
        return None
    fitting = [nt for nt in cands
               if _row_tile_bytes(nt, N, F, Cp, adj_bytes) <= block_budget]
    if want_two_steps:
        pref = [nt for nt in fitting if B * (N // nt) >= 2]
        if pref:
            return max(pref)
    if fitting:
        return max(fitting)
    return min(cands)                     # best effort for very large N


# ---------------------------------------------------------------------------
# Wrapper
# ---------------------------------------------------------------------------

def dense_gcn_conv(x, adj, weight, bias, *, mxu_bf16=False, adj_bf16=True,
                   row_tile=None):
    """DenseGCNConv forward (add_loop=True, improved=False, mask=None).

    x: (B, N, F) or (N, F) f32; adj: (B, N, N) or (N, N); weight: (F, C);
    bias: (C,).  Returns (B, N, C) f32.

    mxu_bf16: feed bf16 operands (f32 accumulate) to the aggregation matmul
              (~3-6x MXU throughput on v6e/v7x, reduced precision).
    adj_bf16: stream the adjacency as bf16 (exact for 0/1 adjacencies);
              pass False for weighted adjacencies requiring full f32.
    row_tile: force the row-tiled path with this tile (multiple of 8 dividing
              N); None = automatic selection.
    """
    # TODO(synk): optional `mask` argument (out * mask) not wired in.
    if x.ndim == 2:
        x = x[None]
    if adj.ndim == 2:
        adj = adj[None]
    B = max(x.shape[0], adj.shape[0])
    N = adj.shape[-1]
    F = x.shape[-1]
    C = weight.shape[1]
    x = jnp.broadcast_to(x.astype(jnp.float32), (B, N, F))
    adj = jnp.broadcast_to(adj, (B, N, N))
    adj_dtype = jnp.bfloat16 if adj_bf16 else jnp.float32
    adj_in = adj.astype(adj_dtype)
    adj_bytes = 2 if adj_bf16 else 4

    # Lane-dense output stores: pad channels only when C is not already a
    # multiple of 128 (avoids the extra output copy in the aligned case).
    if C % 128 == 0:
        Cp = C
        w_p = weight.astype(jnp.float32)
        b_p = bias.reshape(1, C).astype(jnp.float32)
    else:
        Cp = ((C + 127) // 128) * 128
        w_p = jnp.zeros((F, Cp), jnp.float32).at[:, :C].set(
            weight.astype(jnp.float32))
        b_p = jnp.zeros((1, Cp), jnp.float32).at[:, :C].set(
            bias.astype(jnp.float32))

    small_vmem, block_budget, vmem_cap = _vmem_policy()

    # Path selection: batch-tiled (whole graph per block) vs. row-tiled
    # (needed when one graph overflows the block budget, or when the batch
    # grid would leave v7x's second TensorCore idle).
    use_rows = False
    Nt = None
    Bt = None
    if row_tile is not None:
        if N % row_tile or row_tile % 8:
            raise ValueError("row_tile must be a multiple of 8 dividing N")
        use_rows, Nt = True, row_tile
    else:
        Bt = _choose_batch_tile(B, N, F, Cp, adj_bytes, block_budget,
                                want_two_steps=small_vmem)
        if Bt is None or (small_vmem and B // Bt < 2):
            Nt = _choose_row_tile(B, N, F, Cp, adj_bytes, block_budget,
                                  want_two_steps=small_vmem)
            if Nt is not None and Nt < N:
                use_rows = True
        if not use_rows and Bt is None:
            Bt = 1   # TODO(synk): contraction tiling for graphs that overflow
            #          VMEM even at Bt=1 with no valid row tile (best effort).

    flops = 2 * B * N * (F * Cp + N * Cp)
    bytes_accessed = (adj_bytes * B * N * N
                      + 4 * (B * N * F + B * N * Cp + F * Cp + Cp))
    cost = pl.CostEstimate(flops=flops, transcendentals=B * N,
                           bytes_accessed=bytes_accessed)

    if not use_rows:
        grid = (B // Bt,)
        footprint = _batch_tile_bytes(Bt, N, F, Cp, adj_bytes)
        vmem_limit = int(min(max(int(footprint * 1.4), 16 * 2**20), vmem_cap))

        adj_spec = pl.BlockSpec((Bt, N, N), lambda b: (b, 0, 0))
        # On 128-MiB parts (v5e/v6e) a third adjacency buffer hides the
        # longest DMA when the grid is deep enough and VMEM allows.
        if (not small_vmem and grid[0] >= 3
                and footprint + adj_bytes * Bt * N * N <= block_budget):
            try:
                adj_spec = pl.BlockSpec((Bt, N, N), lambda b: (b, 0, 0),
                                        pipeline_mode=pl.Buffered(3))
            except TypeError:
                pass   # fall back to default double buffering

        out_p = pl.pallas_call(
            _make_batch_kernel(mxu_bf16),
            out_shape=jax.ShapeDtypeStruct((B, N, Cp), jnp.float32),
            grid_spec=pltpu.PrefetchScalarGridSpec(
                num_scalar_prefetch=0,
                grid=grid,
                in_specs=[
                    pl.BlockSpec((Bt, N, F), lambda b: (b, 0, 0)),
                    adj_spec,
                    pl.BlockSpec((F, Cp), lambda b: (0, 0)),
                    pl.BlockSpec((1, Cp), lambda b: (0, 0)),
                ],
                out_specs=pl.BlockSpec((Bt, N, Cp), lambda b: (b, 0, 0)),
            ),
            compiler_params=pltpu.CompilerParams(
                dimension_semantics=("parallel",),
                vmem_limit_bytes=vmem_limit),
            cost_estimate=cost,
        )(x, adj_in, w_p, b_p)
    else:
        # D^{-1/2} pre-pass (row tiles cannot see column degrees).  Exact for
        # 0/1 adjacencies; matches "patch diagonal to 1 then row-sum".
        adj_f32 = adj.astype(jnp.float32)
        deg = (jnp.sum(adj_f32, axis=-1)
               - jnp.diagonal(adj_f32, axis1=-2, axis2=-1) + 1.0)
        d = jax.lax.rsqrt(jnp.maximum(deg, 1.0))[..., None]      # (B, N, 1)

        grid = (B, N // Nt)
        footprint = _row_tile_bytes(Nt, N, F, Cp, adj_bytes)
        vmem_limit = int(min(max(int(footprint * 1.4), 16 * 2**20), vmem_cap))

        out_p = pl.pallas_call(
            _make_row_kernel(mxu_bf16, Nt),
            out_shape=jax.ShapeDtypeStruct((B, N, Cp), jnp.float32),
            grid_spec=pltpu.PrefetchScalarGridSpec(
                num_scalar_prefetch=0,
                grid=grid,
                in_specs=[
                    pl.BlockSpec((1, N, 1), lambda b, r: (b, 0, 0)),   # d full
                    pl.BlockSpec((1, Nt, 1), lambda b, r: (b, r, 0)),  # d rows
                    pl.BlockSpec((1, N, F), lambda b, r: (b, 0, 0)),   # x
                    pl.BlockSpec((1, Nt, N), lambda b, r: (b, r, 0)),  # adj rows
                    pl.BlockSpec((F, Cp), lambda b, r: (0, 0)),
                    pl.BlockSpec((1, Cp), lambda b, r: (0, 0)),
                ],
                out_specs=pl.BlockSpec((1, Nt, Cp), lambda b, r: (b, r, 0)),
            ),
            compiler_params=pltpu.CompilerParams(
                dimension_semantics=("parallel", "parallel"),
                vmem_limit_bytes=vmem_limit),
            cost_estimate=cost,
        )(d, d, x, adj_in, w_p, b_p)

    return out_p[:, :, :C] if Cp != C else out_p


def reference(x, adj, weight, bias):
    """Pure-JAX reference mirroring the PyTorch forward (mask=None, add_loop=True)."""
    B, N, _ = adj.shape
    eye = jnp.eye(N, dtype=adj.dtype)
    adj = jnp.where(eye[None] > 0, 1.0, adj)
    out = jnp.matmul(x, weight)
    deg_inv_sqrt = jnp.maximum(adj.sum(-1), 1.0) ** -0.5
    adj = deg_inv_sqrt[..., :, None] * adj * deg_inv_sqrt[..., None, :]
    out = jnp.matmul(adj, out)
    return out + bias


if __name__ == "__main__":
    key = jax.random.PRNGKey(0)
    kx, ka, kw, kx2, ka2 = jax.random.split(key, 5)

    # ---- Test 1: batch-tiled path, exact f32 MXU math --------------------
    B, N, F, C = 2, 16, 8, 32
    x = jax.random.normal(kx, (B, N, F), dtype=jnp.float32)
    adj = (jax.random.uniform(ka, (B, N, N)) > 0.7).astype(jnp.float32)
    adj = jnp.maximum(adj, jnp.swapaxes(adj, -1, -2))  # symmetric 0/1 adjacency
    limit = (6.0 / (F + C)) ** 0.5
    weight = jax.random.uniform(kw, (F, C), minval=-limit, maxval=limit,
                                dtype=jnp.float32)
    bias = jnp.zeros((C,), dtype=jnp.float32)

    out = jax.block_until_ready(dense_gcn_conv(x, adj, weight, bias))
    ref = reference(x, adj, weight, bias)
    assert out.shape == (B, N, C)
    err = jnp.max(jnp.abs(out - ref))
    assert jnp.allclose(out, ref, atol=1e-5, rtol=1e-5), f"max abs err {err}"

    # ---- Test 2: row-tiled path (v7x / large-N fallback), exact f32 ------
    B2, N2 = 1, 32
    x2 = jax.random.normal(kx2, (B2, N2, F), dtype=jnp.float32)
    adj2 = (jax.random.uniform(ka2, (B2, N2, N2)) > 0.7).astype(jnp.float32)
    adj2 = jnp.maximum(adj2, jnp.swapaxes(adj2, -1, -2))
    out2 = jax.block_until_ready(
        dense_gcn_conv(x2, adj2, weight, bias, row_tile=8))
    ref2 = reference(x2, adj2, weight, bias)
    assert out2.shape == (B2, N2, C)
    err2 = jnp.max(jnp.abs(out2 - ref2))
    assert jnp.allclose(out2, ref2, atol=1e-5, rtol=1e-5), f"max abs err {err2}"

    # ---- Test 3: opt-in bf16 MXU operands (looser tolerance) -------------
    out3 = jax.block_until_ready(
        dense_gcn_conv(x, adj, weight, bias, mxu_bf16=True))
    err3 = jnp.max(jnp.abs(out3 - ref))
    assert jnp.allclose(out3, ref, atol=5e-2, rtol=5e-2), f"max abs err {err3}"

    print("KERNEL_OK")
</pallas_src>

<mosaic_0001>
module attributes {stable_mosaic.version = 11 : i64} {
  func.func @kernel(%arg0: i32, %arg1: memref<2x16x8xf32, #tpu.memory_space<vmem>>, %arg2: memref<2x16x16xbf16, #tpu.memory_space<vmem>>, %arg3: memref<8x128xf32, #tpu.memory_space<vmem>>, %arg4: memref<1x128xf32, #tpu.memory_space<vmem>>, %arg5: memref<2x16x128xf32, #tpu.memory_space<vmem>>) attributes {dimension_semantics = [#tpu.dimension_semantics<parallel>], iteration_bounds = array<i64: 1>, scalar_prefetch = 0 : i64, scratch_operands = 0 : i64, tpu.core_type = #tpu.core_type<tc>, window_params = [{transform_indices = @transform_0, window_bounds = array<i64: 2, 16, 8>}, {transform_indices = @transform_1, window_bounds = array<i64: 2, 16, 16>}, {pipeline_mode = #tpu.pipeline_mode<synchronous>, transform_indices = @transform_2, window_bounds = array<i64: 8, 128>}, {pipeline_mode = #tpu.pipeline_mode<synchronous>, transform_indices = @transform_3, window_bounds = array<i64: 1, 128>}, {transform_indices = @transform_4, window_bounds = array<i64: 2, 16, 128>}]} {
    %c0 = arith.constant 0 : index
    %c0_0 = arith.constant 0 : index
    %c0_1 = arith.constant 0 : index
    %0 = vector.load %arg2[%c0, %c0_0, %c0_1] : memref<2x16x16xbf16, #tpu.memory_space<vmem>>, vector<2x16x16xbf16>
    %1 = tpu.iota {dimensions = array<i32: 0>} : vector<16x16xi32>
    %2 = tpu.iota {dimensions = array<i32: 1>} : vector<16x16xi32>
    %3 = arith.cmpi eq, %1, %2 : vector<16x16xi32>
    %4 = vector.shape_cast %3 : vector<16x16xi1> to vector<1x16x16xi1>
    %cst = arith.constant 1.000000e+00 : f32
    %5 = arith.truncf %cst : f32 to bf16
    %6 = vector.shape_cast %4 : vector<1x16x16xi1> to vector<1x16x16xi1>
    %7 = vector.broadcast %6 : vector<1x16x16xi1> to vector<2x16x16xi1>
    %8 = vector.broadcast %5 : bf16 to vector<2x16x16xbf16>
    %9 = arith.select %7, %8, %0 : vector<2x16x16xi1>, vector<2x16x16xbf16>
    %10 = arith.extf %9 : vector<2x16x16xbf16> to vector<2x16x16xf32>
    %cst_2 = arith.constant dense<0.000000e+00> : vector<2x16xf32>
    %11 = vector.multi_reduction <add>, %10, %cst_2 [2] : vector<2x16x16xf32> to vector<2x16xf32>
    %12 = vector.shape_cast %11 : vector<2x16xf32> to vector<2x16x1xf32>
    %cst_3 = arith.constant 1.000000e+00 : f32
    %13 = vector.broadcast %cst_3 : f32 to vector<2x16x1xf32>
    %14 = arith.maximumf %12, %13 : vector<2x16x1xf32>
    %15 = math.rsqrt %14 : vector<2x16x1xf32>
    %c0_4 = arith.constant 0 : index
    %c0_5 = arith.constant 0 : index
    %c0_6 = arith.constant 0 : index
    %16 = vector.load %arg1[%c0_4, %c0_5, %c0_6] : memref<2x16x8xf32, #tpu.memory_space<vmem>>, vector<2x16x8xf32>
    %17 = vector.shape_cast %16 : vector<2x16x8xf32> to vector<32x8xf32>
    %c0_7 = arith.constant 0 : index
    %c0_8 = arith.constant 0 : index
    %18 = vector.load %arg3[%c0_7, %c0_8] : memref<8x128xf32, #tpu.memory_space<vmem>>, vector<8x128xf32>
    %cst_9 = arith.constant dense<0.000000e+00> : vector<32x128xf32>
    %19 = tpu.matmul %17, %18, %cst_9 {dimension_numbers = #tpu.dot_dimension_numbers<[1], [0], [0], [1], [0, 0, 1, 1], [], []>} : vector<32x8xf32>, vector<8x128xf32>, vector<32x128xf32> -> vector<32x128xf32>
    %20 = vector.shape_cast %19 : vector<32x128xf32> to vector<2x16x128xf32>
    %21 = vector.broadcast %15 : vector<2x16x1xf32> to vector<2x16x128xf32>
    %22 = arith.mulf %21, %20 : vector<2x16x128xf32>
    %23 = arith.extf %9 : vector<2x16x16xbf16> to vector<2x16x16xf32>
    "tpu.trace_start"() <{level = 10 : i32, message = "bij,bjc->bic"}> : () -> ()
    %cst_10 = arith.constant dense<0.000000e+00> : vector<2x16x128xf32>
    %24 = tpu.matmul %23, %22, %cst_10 {dimension_numbers = #tpu.dot_dimension_numbers<[2], [1], [1], [2], [0, 0, 0, 1, 1, 2], [0], [0]>} : vector<2x16x16xf32>, vector<2x16x128xf32>, vector<2x16x128xf32> -> vector<2x16x128xf32>
    "tpu.trace_stop"() : () -> ()
    %25 = vector.broadcast %15 : vector<2x16x1xf32> to vector<2x16x128xf32>
    %26 = arith.mulf %25, %24 : vector<2x16x128xf32>
    %c0_11 = arith.constant 0 : index
    %c0_12 = arith.constant 0 : index
    %27 = vector.load %arg4[%c0_11, %c0_12] : memref<1x128xf32, #tpu.memory_space<vmem>>, vector<1x128xf32>
    %28 = vector.shape_cast %27 : vector<1x128xf32> to vector<1x1x128xf32>
    %29 = vector.broadcast %28 : vector<1x1x128xf32> to vector<2x16x128xf32>
    %30 = arith.addf %26, %29 : vector<2x16x128xf32>
    %c0_13 = arith.constant 0 : index
    %c0_14 = arith.constant 0 : index
    %c0_15 = arith.constant 0 : index
    %31 = vector.load %arg5[%c0_13, %c0_14, %c0_15] : memref<2x16x128xf32, #tpu.memory_space<vmem>>, vector<2x16x128xf32>
    tpu.vector_store %arg5[%c0_13, %c0_14, %c0_15], %30 {strides = array<i32>} : memref<2x16x128xf32, #tpu.memory_space<vmem>>, vector<2x16x128xf32>,
    return
  }
  func.func @transform_0(%arg0: i32) -> (i32, i32, i32) {
    %c0_i32 = arith.constant 0 : i32
    %c0_i32_0 = arith.constant 0 : i32
    %c0_i32_1 = arith.constant 0 : i32
    return %arg0, %c0_i32, %c0_i32_0 : i32, i32, i32
  }
  func.func @transform_1(%arg0: i32) -> (i32, i32, i32) {
    %c0_i32 = arith.constant 0 : i32
    %c0_i32_0 = arith.constant 0 : i32
    %c0_i32_1 = arith.constant 0 : i32
    return %arg0, %c0_i32, %c0_i32_0 : i32, i32, i32
  }
  func.func @transform_2(%arg0: i32) -> (i32, i32) {
    %c0_i32 = arith.constant 0 : i32
    %c0_i32_0 = arith.constant 0 : i32
    %c0_i32_1 = arith.constant 0 : i32
    return %c0_i32, %c0_i32_0 : i32, i32
  }
  func.func @transform_3(%arg0: i32) -> (i32, i32) {
    %c0_i32 = arith.constant 0 : i32
    %c0_i32_0 = arith.constant 0 : i32
    %c0_i32_1 = arith.constant 0 : i32
    return %c0_i32, %c0_i32_0 : i32, i32
  }
  func.func @transform_4(%arg0: i32) -> (i32, i32, i32) {
    %c0_i32 = arith.constant 0 : i32
    %c0_i32_0 = arith.constant 0 : i32
    %c0_i32_1 = arith.constant 0 : i32
    return %arg0, %c0_i32, %c0_i32_0 : i32, i32, i32
  }
}

</mosaic_0001>

<llo_original>
// kernel: tpu_custom_call.1
$region0: #{tpu_custom_call.1}
  #allocation0 [shape = 'u32[]', space=smem, size = 0x4, offset = 0x4, fixed_abs, tag = 'smem constant byte address 0x4 - core index']
  #allocation1 [shape = 'u32[144,128]{1,0:T(1,128)}', space=vmem, size = 0x12000, scoped, tag = 'internal scratch']
  %s0 = inlined_call_operand.vmem [shape: f32[2,16,8], index: 0, kind: input, shape index: {}]
  %s1 = inlined_call_operand.vmem [shape: bf16[2,16,16], index: 1, kind: input, shape index: {}]
  %s2 = inlined_call_operand.vmem [shape: f32[8,128], index: 2, kind: input, shape index: {}]
  %s3 = inlined_call_operand.vmem [shape: f32[1,128], index: 3, kind: input, shape index: {}]
  %s4 = inlined_call_operand.hbm [shape: f32[2,16,128], index: 4, kind: output, shape index: {}]
  %s5 = sld [smem:[#allocation0]]
  $region26: #{tpu_custom_call.1} parent=0
    _
  %s7 = ssub.s32 1, %s5
  %s8 = scalar_select 0, %s7, %s5
  $region1: #{tpu_custom_call.1} parent=0
    #allocation2 [shape = 'u8[16384]{0}', space=vmem, size = 0x4000, scoped, tag = 'output window, operand 0, single buffered']
    #allocation3 [shape = 's32[1]{0}', space=sflag, size = 0x4, scoped, tag = 'scoped memory for tpu_custom_call.1']
    %9 = vsyncpa [#allocation3], 0
    // Predicated region
    $region2: #{tpu_custom_call.1} parent=1 // pred_check
      _
    $region3: #{tpu_custom_call.1} parent=1 // pred_check_branch
      %11 = sbr.rel (0) target = $region5
    $region4: #{tpu_custom_call.1} parent=1 // pred_region
      _
    $region5: #{tpu_custom_call.1} parent=1 // pred_fallthru
      _
    // Predicated region
    $region6: #{tpu_custom_call.1} parent=1 // pred_check
      _
    $region7: #{tpu_custom_call.1} parent=1 // pred_check_branch
      %13 = sbr.rel (0) target = $region9
    $region8: #{tpu_custom_call.1} parent=1 // pred_region
      _
    $region9: #{tpu_custom_call.1} parent=1 // pred_fallthru
      _
    // Predicated region
    $region10: #{tpu_custom_call.1} parent=1 // pred_check
      _
    $region11: #{tpu_custom_call.1} parent=1 // pred_check_branch
      %15 = sbr.rel (0) target = $region13
    $region12: #{tpu_custom_call.1} parent=1 // pred_region
      _
    $region13: #{tpu_custom_call.1} parent=1 // pred_fallthru
      _
    // Predicated region
    $region14: #{tpu_custom_call.1} parent=1 // pred_check
      _
    $region15: #{tpu_custom_call.1} parent=1 // pred_check_branch
      %17 = sbr.rel (0) target = $region17
    $region16: #{tpu_custom_call.1} parent=1 // pred_region
      _
    $region17: #{tpu_custom_call.1} parent=1 // pred_fallthru
      _
    %v19 = vld [vmem:[%s1] sm:$0xf]
    %v20 = vld [vmem:[%s1 + $0x4] sm:$0xf]
    %v21 = vld [vmem:[%s1 + $0x8] sm:$0xf]
    %v22 = vld [vmem:[%s1 + $0xc] sm:$0xf]
    %v23 = vlaneseq
    %v24 = vshrl.u32 %v23, 7
    %v25 = vadd.s32 %v24, 8
    %v26 = vlaneseq
    %v27 = vand.u32 %v26, 127
    %vm28 = vcmp.eq.s32.totalorder %v24, %v27
    %vm29 = vcmp.eq.s32.totalorder %v25, %v27
    %v30 = vsel %vm28, 1, 0
    %v31 = vsel %vm29, 1, 0
    %vm32 = vcmp.eq.s32.totalorder %v30, 1
    %vm33 = vcmp.eq.s32.totalorder %v31, 1
    %vm34 = vmpackc.low %vm32, %vm32
    %vm35 = vmpackc.low %vm33, %vm33
    %v36 = vsel %vm34, 1065369472, %v19
    %v37 = vsel %vm35, 1065369472, %v20
    %v38 = vsel %vm34, 1065369472, %v21
    %v39 = vsel %vm35, 1065369472, %v22
    %v40 = vunpack.c.l.bf16 %v36
    %v41 = vunpack.c.l.bf16 %v37
    %v42 = vunpack.c.l.bf16 %v38
    %v43 = vunpack.c.l.bf16 %v39
    %vm44 = vcmask 130048
    %v45 = vsel %vm44, %v40, 0.0
    %46 = vadd.xlane.f32.xlu0 %v45
    %v47 = vpop.xlane.xlu0 %46
    %v48 = vsel %vm44, %v41, 0.0
    %49 = vadd.xlane.f32.xlu0 %v48
    %v50 = vpop.xlane.xlu0 %49
    %v51 = vsel %vm44, %v42, 0.0
    %52 = vadd.xlane.f32.xlu0 %v51
    %v53 = vpop.xlane.xlu0 %52
    %v54 = vsel %vm44, %v43, 0.0
    %55 = vadd.xlane.f32.xlu0 %v54
    %v56 = vpop.xlane.xlu0 %55
    %v57 = vmax.f32 %v47, 1.0
    %v58 = vmax.f32 %v50, 1.0
    %v59 = vmax.f32 %v53, 1.0
    %v60 = vmax.f32 %v56, 1.0
    %v61 = vrsqrt.pop %v57
    %v62 = vrsqrt.pop %v58
    %v63 = vrsqrt.pop %v59
    %v64 = vrsqrt.pop %v60
    %v65 = vld [vmem:[%s0] sm:$0xff]
    %v66 = vld [vmem:[%s0 + $0x8] sm:$0xff]
    %v67 = vld [vmem:[%s0 + $0x10] sm:$0xff]
    %v68 = vld [vmem:[%s0 + $0x18] sm:$0xff]
    %v69 = vld [vmem:[%s2] sm:$0xff]
    %vm70 = vcmask 64512
    %v72 = vsel %vm70, %v65, 0
    %v75 = vsel %vm70, %v66, 0
    %v78 = vsel %vm70, %v67, 0
    %v81 = vsel %vm70, %v68, 0
    %83 = vmatprep.subr.mxu0 0.0
    %84 = vmatpush1.msra.mxu0 %v69
    %85 = vmatprep.subr.mxu0 0.0
    %86 = vmatpush1.msra.mxu0 0.0
    %87 = vmatprep.subr.mxu0 0.0
    %88 = vmatpush1.msra.mxu0 0.0
    %89 = vmatprep.subr.mxu0 0.0
    %90 = vmatpush1.msra.mxu0 0.0
    %91 = vmatprep.subr.mxu0 0.0
    %92 = vmatpush1.msra.mxu0 0.0
    %93 = vmatprep.subr.mxu0 0.0
    %94 = vmatpush1.msra.mxu0 0.0
    %95 = vmatprep.subr.mxu0 0.0
    %96 = vmatpush1.msra.mxu0 0.0
    %97 = vmatprep.subr.mxu0 0.0
    %98 = vmatpush1.msra.mxu0 0.0
    %99 = vmatprep.subr.mxu0 0.0
    %100 = vmatpush1.msra.mxu0 0.0
    %101 = vmatprep.subr.mxu0 0.0
    %102 = vmatpush1.msra.mxu0 0.0
    %103 = vmatprep.subr.mxu0 0.0
    %104 = vmatpush1.msra.mxu0 0.0
    %105 = vmatprep.subr.mxu0 0.0
    %106 = vmatpush1.msra.mxu0 0.0
    %107 = vmatprep.subr.mxu0 0.0
    %108 = vmatpush1.msra.mxu0 0.0
    %109 = vmatprep.subr.mxu0 0.0
    %110 = vmatpush1.msra.mxu0 0.0
    %111 = vmatprep.subr.mxu0 0.0
    %112 = vmatpush1.msra.mxu0 0.0
    %113 = vmatprep.subr.mxu0 0.0
    %114 = vmatpush1.msra.mxu0 0.0
    %115 = vmatprep.subr.mxu0 0.0
    %116 = vmatpush1.msra.mxu0 0.0
    %117 = vmatprep.subr.mxu0 0.0
    %118 = vmatpush1.msra.mxu0 0.0
    %119 = vmatprep.subr.mxu0 0.0
    %120 = vmatpush1.msra.mxu0 0.0
    %121 = vmatprep.subr.mxu0 0.0
    %122 = vmatpush1.msra.mxu0 0.0
    %123 = vmatprep.subr.mxu0 0.0
    %124 = vmatpush1.msra.mxu0 0.0
    %125 = vmatprep.subr.mxu0 0.0
    %126 = vmatpush1.msra.mxu0 0.0
    %127 = vmatprep.subr.mxu0 0.0
    %128 = vmatpush1.msra.mxu0 0.0
    %129 = vmatprep.subr.mxu0 0.0
    %130 = vmatpush1.msra.mxu0 0.0
    %131 = vmatprep.subr.mxu0 0.0
    %132 = vmatpush1.msra.mxu0 0.0
    %133 = vmatprep.subr.mxu0 0.0
    %134 = vmatpush1.msra.mxu0 0.0
    %135 = vmatprep.subr.mxu0 0.0
    %136 = vmatpush1.msra.mxu0 0.0
    %137 = vmatprep.subr.mxu0 0.0
    %138 = vmatpush1.msra.mxu0 0.0
    %139 = vmatprep.subr.mxu0 0.0
    %140 = vmatpush1.msra.mxu0 0.0
    %141 = vmatprep.subr.mxu0 0.0
    %142 = vmatpush1.msra.mxu0 0.0
    %143 = vmatprep.subr.mxu0 0.0
    %144 = vmatpush1.msra.mxu0 0.0
    %145 = vmatprep.subr.mxu0 0.0
    %146 = vmatpush1.msra.mxu0 0.0
    %147 = vmatprep.mubr.f32.mxu0 0.0
    %148 = vmatmul.mubr.f32.gmra.mrb[0].mxu0 %v72
    %v149 = vpop.f32.mrb[0].mxu0
    %v150 = vadd.f32 0.0, %v149
    %v151 = vpop.f32.mrb[0].mxu0
    %152 = vmatprep.mubr.f32.mxu0 0.0
    %153 = vmatmul.mubr.f32.gmra.mrb[0].mxu0 %v75
    %v154 = vpop.f32.mrb[0].mxu0
    %v155 = vadd.f32 0.0, %v154
    %v156 = vpop.f32.mrb[0].mxu0
    %157 = vmatprep.mubr.f32.mxu0 0.0
    %158 = vmatmul.mubr.f32.gmra.mrb[0].mxu0 %v78
    %v159 = vpop.f32.mrb[0].mxu0
    %v160 = vadd.f32 0.0, %v159
    %v161 = vpop.f32.mrb[0].mxu0
    %162 = vmatprep.mubr.f32.mxu0 0.0
    %163 = vmatmul.mubr.f32.gmra.mrb[0].mxu0 %v81
    %v164 = vpop.f32.mrb[0].mxu0
    %v165 = vadd.f32 0.0, %v164
    %v166 = vpop.f32.mrb[0].mxu0
    %167 = vdwg.mxu0
    %v168 = vmul.f32 %v61, %v150
    %v169 = vmul.f32 %v62, %v155
    %v170 = vmul.f32 %v63, %v160
    %v171 = vmul.f32 %v64, %v165
    %v173 = vsel %vm44, %v40, 0
    %v176 = vsel %vm44, %v41, 0
    %178 = vmatprep.subr.mxu0 0.0
    %179 = vmatpush1.msra.mxu0 %v168
    %180 = vmatprep.subr.mxu0 0.0
    %181 = vmatpush1.msra.mxu0 %v169
    %182 = vmatprep.subr.mxu0 0.0
    %183 = vmatpush1.msra.mxu0 0.0
    %184 = vmatprep.subr.mxu0 0.0
    %185 = vmatpush1.msra.mxu0 0.0
    %186 = vmatprep.subr.mxu0 0.0
    %187 = vmatpush1.msra.mxu0 0.0
    %188 = vmatprep.subr.mxu0 0.0
    %189 = vmatpush1.msra.mxu0 0.0
    %190 = vmatprep.subr.mxu0 0.0
    %191 = vmatpush1.msra.mxu0 0.0
    %192 = vmatprep.subr.mxu0 0.0
    %193 = vmatpush1.msra.mxu0 0.0
    %194 = vmatprep.subr.mxu0 0.0
    %195 = vmatpush1.msra.mxu0 0.0
    %196 = vmatprep.subr.mxu0 0.0
    %197 = vmatpush1.msra.mxu0 0.0
    %198 = vmatprep.subr.mxu0 0.0
    %199 = vmatpush1.msra.mxu0 0.0
    %200 = vmatprep.subr.mxu0 0.0
    %201 = vmatpush1.msra.mxu0 0.0
    %202 = vmatprep.subr.mxu0 0.0
    %203 = vmatpush1.msra.mxu0 0.0
    %204 = vmatprep.subr.mxu0 0.0
    %205 = vmatpush1.msra.mxu0 0.0
    %206 = vmatprep.subr.mxu0 0.0
    %207 = vmatpush1.msra.mxu0 0.0
    %208 = vmatprep.subr.mxu0 0.0
    %209 = vmatpush1.msra.mxu0 0.0
    %210 = vmatprep.subr.mxu0 0.0
    %211 = vmatpush1.msra.mxu0 0.0
    %212 = vmatprep.subr.mxu0 0.0
    %213 = vmatpush1.msra.mxu0 0.0
    %214 = vmatprep.subr.mxu0 0.0
    %215 = vmatpush1.msra.mxu0 0.0
    %216 = vmatprep.subr.mxu0 0.0
    %217 = vmatpush1.msra.mxu0 0.0
    %218 = vmatprep.subr.mxu0 0.0
    %219 = vmatpush1.msra.mxu0 0.0
    %220 = vmatprep.subr.mxu0 0.0
    %221 = vmatpush1.msra.mxu0 0.0
    %222 = vmatprep.subr.mxu0 0.0
    %223 = vmatpush1.msra.mxu0 0.0
    %224 = vmatprep.subr.mxu0 0.0
    %225 = vmatpush1.msra.mxu0 0.0
    %226 = vmatprep.subr.mxu0 0.0
    %227 = vmatpush1.msra.mxu0 0.0
    %228 = vmatprep.subr.mxu0 0.0
    %229 = vmatpush1.msra.mxu0 0.0
    %230 = vmatprep.subr.mxu0 0.0
    %231 = vmatpush1.msra.mxu0 0.0
    %232 = vmatprep.subr.mxu0 0.0
    %233 = vmatpush1.msra.mxu0 0.0
    %234 = vmatprep.subr.mxu0 0.0
    %235 = vmatpush1.msra.mxu0 0.0
    %236 = vmatprep.subr.mxu0 0.0
    %237 = vmatpush1.msra.mxu0 0.0
    %238 = vmatprep.subr.mxu0 0.0
    %239 = vmatpush1.msra.mxu0 0.0
    %240 = vmatprep.subr.mxu0 0.0
    %241 = vmatpush1.msra.mxu0 0.0
    %242 = vmatprep.mubr.f32.mxu0 0.0
    %243 = vmatmul.mubr.f32.gmra.mrb[0].mxu0 %v173
    %v244 = vpop.f32.mrb[0].mxu0
    %v245 = vadd.f32 0.0, %v244
    %v246 = vpop.f32.mrb[0].mxu0
    %247 = vmatprep.mubr.f32.mxu0 0.0
    %248 = vmatmul.mubr.f32.gmra.mrb[0].mxu0 %v176
    %v249 = vpop.f32.mrb[0].mxu0
    %v250 = vadd.f32 0.0, %v249
    %v251 = vpop.f32.mrb[0].mxu0
    %252 = vdwg.mxu0
    %v254 = vsel %vm44, %v42, 0
    %v257 = vsel %vm44, %v43, 0
    %259 = vmatprep.subr.mxu0 0.0
    %260 = vmatpush1.msra.mxu0 %v170
    %261 = vmatprep.subr.mxu0 0.0
    %262 = vmatpush1.msra.mxu0 %v171
    %263 = vmatprep.subr.mxu0 0.0
    %264 = vmatpush1.msra.mxu0 0.0
    %265 = vmatprep.subr.mxu0 0.0
    %266 = vmatpush1.msra.mxu0 0.0
    %267 = vmatprep.subr.mxu0 0.0
    %268 = vmatpush1.msra.mxu0 0.0
    %269 = vmatprep.subr.mxu0 0.0
    %270 = vmatpush1.msra.mxu0 0.0
    %271 = vmatprep.subr.mxu0 0.0
    %272 = vmatpush1.msra.mxu0 0.0
    %273 = vmatprep.subr.mxu0 0.0
    %274 = vmatpush1.msra.mxu0 0.0
    %275 = vmatprep.subr.mxu0 0.0
    %276 = vmatpush1.msra.mxu0 0.0
    %277 = vmatprep.subr.mxu0 0.0
    %278 = vmatpush1.msra.mxu0 0.0
    %279 = vmatprep.subr.mxu0 0.0
    %280 = vmatpush1.msra.mxu0 0.0
    %281 = vmatprep.subr.mxu0 0.0
    %282 = vmatpush1.msra.mxu0 0.0
    %283 = vmatprep.subr.mxu0 0.0
    %284 = vmatpush1.msra.mxu0 0.0
    %285 = vmatprep.subr.mxu0 0.0
    %286 = vmatpush1.msra.mxu0 0.0
    %287 = vmatprep.subr.mxu0 0.0
    %288 = vmatpush1.msra.mxu0 0.0
    %289 = vmatprep.subr.mxu0 0.0
    %290 = vmatpush1.msra.mxu0 0.0
    %291 = vmatprep.subr.mxu0 0.0
    %292 = vmatpush1.msra.mxu0 0.0
    %293 = vmatprep.subr.mxu0 0.0
    %294 = vmatpush1.msra.mxu0 0.0
    %295 = vmatprep.subr.mxu0 0.0
    %296 = vmatpush1.msra.mxu0 0.0
    %297 = vmatprep.subr.mxu0 0.0
    %298 = vmatpush1.msra.mxu0 0.0
    %299 = vmatprep.subr.mxu0 0.0
    %300 = vmatpush1.msra.mxu0 0.0
    %301 = vmatprep.subr.mxu0 0.0
    %302 = vmatpush1.msra.mxu0 0.0
    %303 = vmatprep.subr.mxu0 0.0
    %304 = vmatpush1.msra.mxu0 0.0
    %305 = vmatprep.subr.mxu0 0.0
    %306 = vmatpush1.msra.mxu0 0.0
    %307 = vmatprep.subr.mxu0 0.0
    %308 = vmatpush1.msra.mxu0 0.0
    %309 = vmatprep.subr.mxu0 0.0
    %310 = vmatpush1.msra.mxu0 0.0
    %311 = vmatprep.subr.mxu0 0.0
    %312 = vmatpush1.msra.mxu0 0.0
    %313 = vmatprep.subr.mxu0 0.0
    %314 = vmatpush1.msra.mxu0 0.0
    %315 = vmatprep.subr.mxu0 0.0
    %316 = vmatpush1.msra.mxu0 0.0
    %317 = vmatprep.subr.mxu0 0.0
    %318 = vmatpush1.msra.mxu0 0.0
    %319 = vmatprep.subr.mxu0 0.0
    %320 = vmatpush1.msra.mxu0 0.0
    %321 = vmatprep.subr.mxu0 0.0
    %322 = vmatpush1.msra.mxu0 0.0
    %323 = vmatprep.mubr.f32.mxu0 0.0
    %324 = vmatmul.mubr.f32.gmra.mrb[0].mxu0 %v254
    %v325 = vpop.f32.mrb[0].mxu0
    %v326 = vadd.f32 0.0, %v325
    %v327 = vpop.f32.mrb[0].mxu0
    %328 = vmatprep.mubr.f32.mxu0 0.0
    %329 = vmatmul.mubr.f32.gmra.mrb[0].mxu0 %v257
    %v330 = vpop.f32.mrb[0].mxu0
    %v331 = vadd.f32 0.0, %v330
    %v332 = vpop.f32.mrb[0].mxu0
    %333 = vdwg.mxu0
    %v334 = vmul.f32 %v61, %v245
    %v335 = vmul.f32 %v62, %v250
    %v336 = vmul.f32 %v63, %v326
    %v337 = vmul.f32 %v64, %v331
    %v338 = vld [vmem:[%s3] sm:$0x1]
    %v340 = vlaneseq
    %v341 = vshrl.u32 %v340, 7
    %v342 = vsub.s32 0, %v341
    %v343 = vrot.slane %v338, %v342
    %v345 = vadd.f32 %v334, %v343
    %v346 = vadd.f32 %v335, %v343
    %v347 = vadd.f32 %v336, %v343
    %v348 = vadd.f32 %v337, %v343
    %349 = vst [vmem:[#allocation2] sm:$0xff] %v345
    %350 = vst [vmem:[#allocation2 + $0x8] sm:$0xff] %v346
    %351 = vst [vmem:[#allocation2 + $0x10] sm:$0xff] %v347
    %352 = vst [vmem:[#allocation2 + $0x18] sm:$0xff] %v348
    // Predicated region
    $region18: #{tpu_custom_call.1} parent=1 // pred_check
      _
    $region19: #{tpu_custom_call.1} parent=1 // pred_check_branch
      %354 = sbr.rel (0) target = $region21
    $region20: #{tpu_custom_call.1} parent=1 // pred_region
      %s356 = ssub.s32 512, 512
      %357 = vsyncadd [#allocation3], %s356
      %s358 = sshll.u32 [#allocation2], 4
      %s359 = int_to_ptr.vmem [resolvable:$true] %s358
      %364 = dma.vmem_to_hbm [thread:$0]  %s359, 512, %s4, [#allocation3], 128, 128, 8
    $region21: #{tpu_custom_call.1} parent=1 // pred_fallthru
      _
    // Predicated region
    $region22: #{tpu_custom_call.1} parent=1 // pred_check
      _
    $region23: #{tpu_custom_call.1} parent=1 // pred_check_branch
      %366 = sbr.rel (0) target = $region25
    $region24: #{tpu_custom_call.1} parent=1 // pred_region
      %367 = dma.done [#allocation3], 512
    $region25: #{tpu_custom_call.1} parent=1 // pred_fallthru
      _
    %368 = vsyncpa [#allocation3], 1

</llo_original>
